<compile_context>
chip_gen: v7x
topology: tpu7x:2x2x1
jax: 0.10.0
libtpu: 0.0.40
codegen_flags: <defaults>
</compile_context>

<pallas_src>
import functools

import jax
import jax.numpy as jnp
from jax.experimental import pallas as pl
from jax.experimental.pallas import tpu as pltpu


def _pixel_shuffle3d_kernel(x_ref, o_ref, *, r, H, seg):
    # x_ref: (r[rd], r[rh], Nt, H*seg)   lanes pack (h, w, rw, c), seg = W*r*C
    # o_ref: (Nt, r*H*r*seg)             lanes pack (rd, h, rh, w, rw, c)
    #
    # r*r*H static, full-width, lane-dense copies.  All lane offsets are static
    # multiples of `seg`; with seg % 128 == 0 (wrapper-guaranteed fast path)
    # every load/store is a plain unmasked vld/vst.
    # TODO(synk): for very large H, switch the h loop to lax.fori_loop with
    # pl.ds/pl.multiple_of offsets to bound unrolled code size.
    for rd in range(r):
        for h in range(H):
            for rh in range(r):
                dst = ((rd * H + h) * r + rh) * seg
                o_ref[:, dst:dst + seg] = x_ref[rd, rh, :, h * seg:(h + 1) * seg]


def _reference_pixel_shuffle_3d(x, r):
    # Pure-JAX transcription of the PyTorch forward (view / permute / view).
    B, Cin, D, H, W = x.shape
    C = Cin // (r ** 3)
    v = x.reshape(B, C, r, r, r, D, H, W)
    v = jnp.transpose(v, (0, 1, 5, 2, 6, 3, 7, 4))
    return v.reshape(B, C, D * r, H * r, W * r)


def _pad(v, m):
    return -(-v // m) * m


def pixel_shuffle_3d(x, upscale_factor):
    """3D pixel shuffle: (B, C*r^3, D, H, W) -> (B, C, D*r, H*r, W*r)."""
    r = int(upscale_factor)
    B, Cin, D, H, W = x.shape
    assert Cin % (r ** 3) == 0, "channels must be divisible by upscale_factor**3"
    C = Cin // (r ** 3)

    itemsize = jnp.dtype(x.dtype).itemsize
    sub = {8: 4, 4: 8, 2: 16, 1: 32}.get(itemsize, 8)
    seg = W * r * C              # smallest copy width: one (w, rw, c) slab
    lane_in = H * seg            # input lanes pack (h, w, rw, c)
    lane_out = r * r * lane_in   # output lanes pack (rd, h, rh, w, rw, c)
    N = B * D                    # batch and depth fused into one row axis

    # Fast path needs 128-aligned copy segments (plain unmasked stores).
    if seg % 128 != 0:
        # TODO(synk): pad C (or fold D into the lane packing) instead of
        # falling back to the XLA path for misaligned W*r*C.
        return _reference_pixel_shuffle_3d(x, r)

    # ---- generation-aware per-step VMEM budget ----
    try:
        vmem_cap = int(pltpu.get_tpu_info().vmem_capacity_bytes)
    except Exception:
        vmem_cap = 64 << 20                       # conservative (v7x per-core)
    step_budget = max(4 << 20, min(32 << 20, vmem_cap // 4))

    def block_bytes(nt):
        # input block (r, r, nt, lane_in) + output block (nt, lane_out),
        # padded to the (sublane, 128) VMEM tile.
        rows = _pad(nt, sub)
        return (r * r * rows * _pad(lane_in, 128)
                + rows * _pad(lane_out, 128)) * itemsize

    fitting = [d for d in range(1, N + 1)
               if N % d == 0 and block_bytes(d) <= step_budget]
    if not fitting:
        # TODO(synk): add an extra H / lane tiling level for extreme H*W*C
        # shapes instead of falling back to XLA.
        return _reference_pixel_shuffle_3d(x, r)

    def score(d):
        aligned = (d % sub == 0) or (d == N)   # full vreg / VMEM-tile rows
        multi_step = (N // d) >= 2             # >=2 steps keeps both v7x TCs busy
        return (aligned, multi_step, d)

    Nt = max(fitting, key=score)
    n_steps = N // Nt

    # Pipeline double-buffers each block; never clamp below the actual need.
    vmem_limit = int(min(vmem_cap,
                         max(16 << 20, 2 * block_bytes(Nt) + (2 << 20))))

    # ---- input glue (one fused XLA copy): NCDHW -> (rd, rh, N, (h,w,rw,c)) ----
    x8 = x.reshape(B, C, r, r, r, D, H, W)               # (b, c, rd, rh, rw, d, h, w)
    x_t = jnp.transpose(x8, (2, 3, 0, 5, 6, 7, 4, 1))    # (rd, rh, b, d, h, w, rw, c)
    x_k = x_t.reshape(r, r, N, lane_in)

    kernel = functools.partial(_pixel_shuffle3d_kernel, r=r, H=H, seg=seg)

    out_k = pl.pallas_call(
        kernel,
        out_shape=jax.ShapeDtypeStruct((N, lane_out), x.dtype),
        grid=(n_steps,),
        in_specs=[pl.BlockSpec((r, r, Nt, lane_in), lambda i: (0, 0, i, 0))],
        out_specs=pl.BlockSpec((Nt, lane_out), lambda i: (i, 0)),
        compiler_params=pltpu.CompilerParams(
            dimension_semantics=("parallel",),
            vmem_limit_bytes=vmem_limit),
        cost_estimate=pl.CostEstimate(
            flops=0, transcendentals=0,
            bytes_accessed=2 * x.size * itemsize),
    )(x_k)

    # ---- output glue: packed lanes are already in the output row-major order
    # (d, rd, h, rh, w, rw, c), so the channels-last collapse is a pure logical
    # reshape; one XLA transpose restores the NCDHW module layout. ----
    out_cl = out_k.reshape(B, D * r, H * r, W * r, C)     # (B, Do, Ho, Wo, C)
    return jnp.transpose(out_cl, (0, 4, 1, 2, 3))          # (B, C, Do, Ho, Wo)


if __name__ == "__main__":
    # PixelShuffle3D has no learnable parameters (only the upscale_factor hyperparam).
    upscale = 2
    B, C_out, D, H, W = 2, 128, 4, 4, 4
    Cin = C_out * upscale ** 3

    key = jax.random.PRNGKey(0)
    x = jax.random.normal(key, (B, Cin, D, H, W), dtype=jnp.float32)

    out = jax.block_until_ready(pixel_shuffle_3d(x, upscale))
    ref = _reference_pixel_shuffle_3d(x, upscale)

    assert out.shape == (B, C_out, D * upscale, H * upscale, W * upscale), out.shape
    assert out.dtype == x.dtype
    assert bool(jnp.all(out == ref)), "mismatch vs reference pixel shuffle"

    print("KERNEL_OK")
</pallas_src>

<mosaic_0001>
module attributes {stable_mosaic.version = 11 : i64} {
  func.func @_pixel_shuffle3d_kernel(%arg0: i32, %arg1: memref<2x2x8x4096xf32, #tpu.memory_space<vmem>>, %arg2: memref<8x16384xf32, #tpu.memory_space<vmem>>) attributes {dimension_semantics = [#tpu.dimension_semantics<parallel>], iteration_bounds = array<i64: 1>, scalar_prefetch = 0 : i64, scratch_operands = 0 : i64, tpu.core_type = #tpu.core_type<tc>, window_params = [{transform_indices = @transform_0, window_bounds = array<i64: 2, 2, 8, 4096>}, {transform_indices = @transform_1, window_bounds = array<i64: 8, 16384>}]} {
    %c0 = arith.constant 0 : index
    %c0_0 = arith.constant 0 : index
    %c0_1 = arith.constant 0 : index
    %c0_2 = arith.constant 0 : index
    %0 = vector.load %arg1[%c0, %c0_0, %c0_1, %c0_2] : memref<2x2x8x4096xf32, #tpu.memory_space<vmem>>, vector<1x1x8x1024xf32>
    %1 = vector.shape_cast %0 : vector<1x1x8x1024xf32> to vector<8x1024xf32>
    %c0_3 = arith.constant 0 : index
    %c0_4 = arith.constant 0 : index
    %2 = vector.load %arg2[%c0_3, %c0_4] : memref<8x16384xf32, #tpu.memory_space<vmem>>, vector<8x1024xf32>
    tpu.vector_store %arg2[%c0_3, %c0_4], %1 {strides = array<i32>} : memref<8x16384xf32, #tpu.memory_space<vmem>>, vector<8x1024xf32>,
    %c0_5 = arith.constant 0 : index
    %c1 = arith.constant 1 : index
    %c0_6 = arith.constant 0 : index
    %c0_7 = arith.constant 0 : index
    %3 = vector.load %arg1[%c0_5, %c1, %c0_6, %c0_7] : memref<2x2x8x4096xf32, #tpu.memory_space<vmem>>, vector<1x1x8x1024xf32>
    %4 = vector.shape_cast %3 : vector<1x1x8x1024xf32> to vector<8x1024xf32>
    %c0_8 = arith.constant 0 : index
    %c1024 = arith.constant 1024 : index
    %5 = vector.load %arg2[%c0_8, %c1024] : memref<8x16384xf32, #tpu.memory_space<vmem>>, vector<8x1024xf32>
    tpu.vector_store %arg2[%c0_8, %c1024], %4 {strides = array<i32>} : memref<8x16384xf32, #tpu.memory_space<vmem>>, vector<8x1024xf32>,
    %c0_9 = arith.constant 0 : index
    %c0_10 = arith.constant 0 : index
    %c0_11 = arith.constant 0 : index
    %c1024_12 = arith.constant 1024 : index
    %6 = vector.load %arg1[%c0_9, %c0_10, %c0_11, %c1024_12] : memref<2x2x8x4096xf32, #tpu.memory_space<vmem>>, vector<1x1x8x1024xf32>
    %7 = vector.shape_cast %6 : vector<1x1x8x1024xf32> to vector<8x1024xf32>
    %c0_13 = arith.constant 0 : index
    %c2048 = arith.constant 2048 : index
    %8 = vector.load %arg2[%c0_13, %c2048] : memref<8x16384xf32, #tpu.memory_space<vmem>>, vector<8x1024xf32>
    tpu.vector_store %arg2[%c0_13, %c2048], %7 {strides = array<i32>} : memref<8x16384xf32, #tpu.memory_space<vmem>>, vector<8x1024xf32>,
    %c0_14 = arith.constant 0 : index
    %c1_15 = arith.constant 1 : index
    %c0_16 = arith.constant 0 : index
    %c1024_17 = arith.constant 1024 : index
    %9 = vector.load %arg1[%c0_14, %c1_15, %c0_16, %c1024_17] : memref<2x2x8x4096xf32, #tpu.memory_space<vmem>>, vector<1x1x8x1024xf32>
    %10 = vector.shape_cast %9 : vector<1x1x8x1024xf32> to vector<8x1024xf32>
    %c0_18 = arith.constant 0 : index
    %c3072 = arith.constant 3072 : index
    %11 = vector.load %arg2[%c0_18, %c3072] : memref<8x16384xf32, #tpu.memory_space<vmem>>, vector<8x1024xf32>
    tpu.vector_store %arg2[%c0_18, %c3072], %10 {strides = array<i32>} : memref<8x16384xf32, #tpu.memory_space<vmem>>, vector<8x1024xf32>,
    %c0_19 = arith.constant 0 : index
    %c0_20 = arith.constant 0 : index
    %c0_21 = arith.constant 0 : index
    %c2048_22 = arith.constant 2048 : index
    %12 = vector.load %arg1[%c0_19, %c0_20, %c0_21, %c2048_22] : memref<2x2x8x4096xf32, #tpu.memory_space<vmem>>, vector<1x1x8x1024xf32>
    %13 = vector.shape_cast %12 : vector<1x1x8x1024xf32> to vector<8x1024xf32>
    %c0_23 = arith.constant 0 : index
    %c4096 = arith.constant 4096 : index
    %14 = vector.load %arg2[%c0_23, %c4096] : memref<8x16384xf32, #tpu.memory_space<vmem>>, vector<8x1024xf32>
    tpu.vector_store %arg2[%c0_23, %c4096], %13 {strides = array<i32>} : memref<8x16384xf32, #tpu.memory_space<vmem>>, vector<8x1024xf32>,
    %c0_24 = arith.constant 0 : index
    %c1_25 = arith.constant 1 : index
    %c0_26 = arith.constant 0 : index
    %c2048_27 = arith.constant 2048 : index
    %15 = vector.load %arg1[%c0_24, %c1_25, %c0_26, %c2048_27] : memref<2x2x8x4096xf32, #tpu.memory_space<vmem>>, vector<1x1x8x1024xf32>
    %16 = vector.shape_cast %15 : vector<1x1x8x1024xf32> to vector<8x1024xf32>
    %c0_28 = arith.constant 0 : index
    %c5120 = arith.constant 5120 : index
    %17 = vector.load %arg2[%c0_28, %c5120] : memref<8x16384xf32, #tpu.memory_space<vmem>>, vector<8x1024xf32>
    tpu.vector_store %arg2[%c0_28, %c5120], %16 {strides = array<i32>} : memref<8x16384xf32, #tpu.memory_space<vmem>>, vector<8x1024xf32>,
    %c0_29 = arith.constant 0 : index
    %c0_30 = arith.constant 0 : index
    %c0_31 = arith.constant 0 : index
    %c3072_32 = arith.constant 3072 : index
    %18 = vector.load %arg1[%c0_29, %c0_30, %c0_31, %c3072_32] : memref<2x2x8x4096xf32, #tpu.memory_space<vmem>>, vector<1x1x8x1024xf32>
    %19 = vector.shape_cast %18 : vector<1x1x8x1024xf32> to vector<8x1024xf32>
    %c0_33 = arith.constant 0 : index
    %c6144 = arith.constant 6144 : index
    %20 = vector.load %arg2[%c0_33, %c6144] : memref<8x16384xf32, #tpu.memory_space<vmem>>, vector<8x1024xf32>
    tpu.vector_store %arg2[%c0_33, %c6144], %19 {strides = array<i32>} : memref<8x16384xf32, #tpu.memory_space<vmem>>, vector<8x1024xf32>,
    %c0_34 = arith.constant 0 : index
    %c1_35 = arith.constant 1 : index
    %c0_36 = arith.constant 0 : index
    %c3072_37 = arith.constant 3072 : index
    %21 = vector.load %arg1[%c0_34, %c1_35, %c0_36, %c3072_37] : memref<2x2x8x4096xf32, #tpu.memory_space<vmem>>, vector<1x1x8x1024xf32>
    %22 = vector.shape_cast %21 : vector<1x1x8x1024xf32> to vector<8x1024xf32>
    %c0_38 = arith.constant 0 : index
    %c7168 = arith.constant 7168 : index
    %23 = vector.load %arg2[%c0_38, %c7168] : memref<8x16384xf32, #tpu.memory_space<vmem>>, vector<8x1024xf32>
    tpu.vector_store %arg2[%c0_38, %c7168], %22 {strides = array<i32>} : memref<8x16384xf32, #tpu.memory_space<vmem>>, vector<8x1024xf32>,
    %c1_39 = arith.constant 1 : index
    %c0_40 = arith.constant 0 : index
    %c0_41 = arith.constant 0 : index
    %c0_42 = arith.constant 0 : index
    %24 = vector.load %arg1[%c1_39, %c0_40, %c0_41, %c0_42] : memref<2x2x8x4096xf32, #tpu.memory_space<vmem>>, vector<1x1x8x1024xf32>
    %25 = vector.shape_cast %24 : vector<1x1x8x1024xf32> to vector<8x1024xf32>
    %c0_43 = arith.constant 0 : index
    %c8192 = arith.constant 8192 : index
    %26 = vector.load %arg2[%c0_43, %c8192] : memref<8x16384xf32, #tpu.memory_space<vmem>>, vector<8x1024xf32>
    tpu.vector_store %arg2[%c0_43, %c8192], %25 {strides = array<i32>} : memref<8x16384xf32, #tpu.memory_space<vmem>>, vector<8x1024xf32>,
    %c1_44 = arith.constant 1 : index
    %c1_45 = arith.constant 1 : index
    %c0_46 = arith.constant 0 : index
    %c0_47 = arith.constant 0 : index
    %27 = vector.load %arg1[%c1_44, %c1_45, %c0_46, %c0_47] : memref<2x2x8x4096xf32, #tpu.memory_space<vmem>>, vector<1x1x8x1024xf32>
    %28 = vector.shape_cast %27 : vector<1x1x8x1024xf32> to vector<8x1024xf32>
    %c0_48 = arith.constant 0 : index
    %c9216 = arith.constant 9216 : index
    %29 = vector.load %arg2[%c0_48, %c9216] : memref<8x16384xf32, #tpu.memory_space<vmem>>, vector<8x1024xf32>
    tpu.vector_store %arg2[%c0_48, %c9216], %28 {strides = array<i32>} : memref<8x16384xf32, #tpu.memory_space<vmem>>, vector<8x1024xf32>,
    %c1_49 = arith.constant 1 : index
    %c0_50 = arith.constant 0 : index
    %c0_51 = arith.constant 0 : index
    %c1024_52 = arith.constant 1024 : index
    %30 = vector.load %arg1[%c1_49, %c0_50, %c0_51, %c1024_52] : memref<2x2x8x4096xf32, #tpu.memory_space<vmem>>, vector<1x1x8x1024xf32>
    %31 = vector.shape_cast %30 : vector<1x1x8x1024xf32> to vector<8x1024xf32>
    %c0_53 = arith.constant 0 : index
    %c10240 = arith.constant 10240 : index
    %32 = vector.load %arg2[%c0_53, %c10240] : memref<8x16384xf32, #tpu.memory_space<vmem>>, vector<8x1024xf32>
    tpu.vector_store %arg2[%c0_53, %c10240], %31 {strides = array<i32>} : memref<8x16384xf32, #tpu.memory_space<vmem>>, vector<8x1024xf32>,
    %c1_54 = arith.constant 1 : index
    %c1_55 = arith.constant 1 : index
    %c0_56 = arith.constant 0 : index
    %c1024_57 = arith.constant 1024 : index
    %33 = vector.load %arg1[%c1_54, %c1_55, %c0_56, %c1024_57] : memref<2x2x8x4096xf32, #tpu.memory_space<vmem>>, vector<1x1x8x1024xf32>
    %34 = vector.shape_cast %33 : vector<1x1x8x1024xf32> to vector<8x1024xf32>
    %c0_58 = arith.constant 0 : index
    %c11264 = arith.constant 11264 : index
    %35 = vector.load %arg2[%c0_58, %c11264] : memref<8x16384xf32, #tpu.memory_space<vmem>>, vector<8x1024xf32>
    tpu.vector_store %arg2[%c0_58, %c11264], %34 {strides = array<i32>} : memref<8x16384xf32, #tpu.memory_space<vmem>>, vector<8x1024xf32>,
    %c1_59 = arith.constant 1 : index
    %c0_60 = arith.constant 0 : index
    %c0_61 = arith.constant 0 : index
    %c2048_62 = arith.constant 2048 : index
    %36 = vector.load %arg1[%c1_59, %c0_60, %c0_61, %c2048_62] : memref<2x2x8x4096xf32, #tpu.memory_space<vmem>>, vector<1x1x8x1024xf32>
    %37 = vector.shape_cast %36 : vector<1x1x8x1024xf32> to vector<8x1024xf32>
    %c0_63 = arith.constant 0 : index
    %c12288 = arith.constant 12288 : index
    %38 = vector.load %arg2[%c0_63, %c12288] : memref<8x16384xf32, #tpu.memory_space<vmem>>, vector<8x1024xf32>
    tpu.vector_store %arg2[%c0_63, %c12288], %37 {strides = array<i32>} : memref<8x16384xf32, #tpu.memory_space<vmem>>, vector<8x1024xf32>,
    %c1_64 = arith.constant 1 : index
    %c1_65 = arith.constant 1 : index
    %c0_66 = arith.constant 0 : index
    %c2048_67 = arith.constant 2048 : index
    %39 = vector.load %arg1[%c1_64, %c1_65, %c0_66, %c2048_67] : memref<2x2x8x4096xf32, #tpu.memory_space<vmem>>, vector<1x1x8x1024xf32>
    %40 = vector.shape_cast %39 : vector<1x1x8x1024xf32> to vector<8x1024xf32>
    %c0_68 = arith.constant 0 : index
    %c13312 = arith.constant 13312 : index
    %41 = vector.load %arg2[%c0_68, %c13312] : memref<8x16384xf32, #tpu.memory_space<vmem>>, vector<8x1024xf32>
    tpu.vector_store %arg2[%c0_68, %c13312], %40 {strides = array<i32>} : memref<8x16384xf32, #tpu.memory_space<vmem>>, vector<8x1024xf32>,
    %c1_69 = arith.constant 1 : index
    %c0_70 = arith.constant 0 : index
    %c0_71 = arith.constant 0 : index
    %c3072_72 = arith.constant 3072 : index
    %42 = vector.load %arg1[%c1_69, %c0_70, %c0_71, %c3072_72] : memref<2x2x8x4096xf32, #tpu.memory_space<vmem>>, vector<1x1x8x1024xf32>
    %43 = vector.shape_cast %42 : vector<1x1x8x1024xf32> to vector<8x1024xf32>
    %c0_73 = arith.constant 0 : index
    %c14336 = arith.constant 14336 : index
    %44 = vector.load %arg2[%c0_73, %c14336] : memref<8x16384xf32, #tpu.memory_space<vmem>>, vector<8x1024xf32>
    tpu.vector_store %arg2[%c0_73, %c14336], %43 {strides = array<i32>} : memref<8x16384xf32, #tpu.memory_space<vmem>>, vector<8x1024xf32>,
    %c1_74 = arith.constant 1 : index
    %c1_75 = arith.constant 1 : index
    %c0_76 = arith.constant 0 : index
    %c3072_77 = arith.constant 3072 : index
    %45 = vector.load %arg1[%c1_74, %c1_75, %c0_76, %c3072_77] : memref<2x2x8x4096xf32, #tpu.memory_space<vmem>>, vector<1x1x8x1024xf32>
    %46 = vector.shape_cast %45 : vector<1x1x8x1024xf32> to vector<8x1024xf32>
    %c0_78 = arith.constant 0 : index
    %c15360 = arith.constant 15360 : index
    %47 = vector.load %arg2[%c0_78, %c15360] : memref<8x16384xf32, #tpu.memory_space<vmem>>, vector<8x1024xf32>
    tpu.vector_store %arg2[%c0_78, %c15360], %46 {strides = array<i32>} : memref<8x16384xf32, #tpu.memory_space<vmem>>, vector<8x1024xf32>,
    return
  }
  func.func @transform_0(%arg0: i32) -> (i32, i32, i32, i32) {
    %c0_i32 = arith.constant 0 : i32
    %c0_i32_0 = arith.constant 0 : i32
    %c0_i32_1 = arith.constant 0 : i32
    %c0_i32_2 = arith.constant 0 : i32
    return %c0_i32, %c0_i32_0, %arg0, %c0_i32_1 : i32, i32, i32, i32
  }
  func.func @transform_1(%arg0: i32) -> (i32, i32) {
    %c0_i32 = arith.constant 0 : i32
    %c0_i32_0 = arith.constant 0 : i32
    return %arg0, %c0_i32 : i32, i32
  }
}

</mosaic_0001>

<llo_original>
// kernel: tpu_custom_call.1
$region0: #{tpu_custom_call.1}
  #allocation0 [shape = 'u32[]', space=smem, size = 0x4, offset = 0x4, fixed_abs, tag = 'smem constant byte address 0x4 - core index']
  #allocation1 [shape = 'u32[144,128]{1,0:T(1,128)}', space=vmem, size = 0x12000, scoped, tag = 'internal scratch']
  %s0 = inlined_call_operand.hbm [shape: f32[2,2,8,4096], index: 0, kind: input, shape index: {}]
  %s1 = inlined_call_operand.hbm [shape: f32[8,16384], index: 1, kind: output, shape index: {}]
  %s2 = sld [smem:[#allocation0]]
  $region18: #{tpu_custom_call.1} parent=0
    _
  %s4 = ssub.s32 1, %s2
  %s5 = scalar_select 0, %s4, %s2
  $region1: #{tpu_custom_call.1} parent=0
    #allocation2 [shape = 'u8[524288]{0}', space=vmem, size = 0x80000, scoped, tag = 'input window, operand 0, single buffered']
    #allocation3 [shape = 's32[1]{0}', space=sflag, size = 0x4, scoped, tag = 'scoped memory for tpu_custom_call.1']
    #allocation4 [shape = 's32[1]{0}', space=sflag, size = 0x4, scoped, tag = 'scoped memory for tpu_custom_call.1']
    #allocation5 [shape = 'u8[524288]{0}', space=vmem, size = 0x80000, scoped, tag = 'output window, operand 0, single buffered']
    %6 = vsyncpa [#allocation3], 0
    %7 = vsyncpa [#allocation4], 0
    // Predicated region
    $region2: #{tpu_custom_call.1} parent=1 // pred_check
      _
    $region3: #{tpu_custom_call.1} parent=1 // pred_check_branch
      %9 = sbr.rel (0) target = $region5
    $region4: #{tpu_custom_call.1} parent=1 // pred_region
      %s11 = ssub.s32 16384, 16384
      %12 = vsyncadd [#allocation3], %s11
      %s13 = sshll.u32 [#allocation2], 4
      %s14 = int_to_ptr.vmem [resolvable:$true] %s13
      %19 = dma.hbm_to_vmem [thread:$0]  %s0, 16384, %s14, [#allocation3], 4096, 4096, 256
    $region5: #{tpu_custom_call.1} parent=1 // pred_fallthru
      _
    // Predicated region
    $region6: #{tpu_custom_call.1} parent=1 // pred_check
      _
    $region7: #{tpu_custom_call.1} parent=1 // pred_check_branch
      %21 = sbr.rel (0) target = $region9
    $region8: #{tpu_custom_call.1} parent=1 // pred_region
      %22 = dma.done [#allocation3], 16384
    $region9: #{tpu_custom_call.1} parent=1 // pred_fallthru
      _
    %v23 = vld [vmem:[#allocation2] sm:$0xff]
    %v24 = vld [vmem:[#allocation2 + $0x8] sm:$0xff]
    %v25 = vld [vmem:[#allocation2 + $0x10] sm:$0xff]
    %v26 = vld [vmem:[#allocation2 + $0x18] sm:$0xff]
    %v27 = vld [vmem:[#allocation2 + $0x20] sm:$0xff]
    %v28 = vld [vmem:[#allocation2 + $0x28] sm:$0xff]
    %v29 = vld [vmem:[#allocation2 + $0x30] sm:$0xff]
    %v30 = vld [vmem:[#allocation2 + $0x38] sm:$0xff]
    %31 = vst [vmem:[#allocation5] sm:$0xff] %v23
    %32 = vst [vmem:[#allocation5 + $0x8] sm:$0xff] %v24
    %33 = vst [vmem:[#allocation5 + $0x10] sm:$0xff] %v25
    %34 = vst [vmem:[#allocation5 + $0x18] sm:$0xff] %v26
    %35 = vst [vmem:[#allocation5 + $0x20] sm:$0xff] %v27
    %36 = vst [vmem:[#allocation5 + $0x28] sm:$0xff] %v28
    %37 = vst [vmem:[#allocation5 + $0x30] sm:$0xff] %v29
    %38 = vst [vmem:[#allocation5 + $0x38] sm:$0xff] %v30
    %s39 = scalar_lea.vmem [#allocation2], 256
    %v40 = vld [vmem:[%s39] sm:$0xff]
    %v41 = vld [vmem:[%s39 + $0x8] sm:$0xff]
    %v42 = vld [vmem:[%s39 + $0x10] sm:$0xff]
    %v43 = vld [vmem:[%s39 + $0x18] sm:$0xff]
    %v44 = vld [vmem:[%s39 + $0x20] sm:$0xff]
    %v45 = vld [vmem:[%s39 + $0x28] sm:$0xff]
    %v46 = vld [vmem:[%s39 + $0x30] sm:$0xff]
    %v47 = vld [vmem:[%s39 + $0x38] sm:$0xff]
    %48 = vst [vmem:[#allocation5 + $0x40] sm:$0xff] %v40
    %49 = vst [vmem:[#allocation5 + $0x48] sm:$0xff] %v41
    %50 = vst [vmem:[#allocation5 + $0x50] sm:$0xff] %v42
    %51 = vst [vmem:[#allocation5 + $0x58] sm:$0xff] %v43
    %52 = vst [vmem:[#allocation5 + $0x60] sm:$0xff] %v44
    %53 = vst [vmem:[#allocation5 + $0x68] sm:$0xff] %v45
    %54 = vst [vmem:[#allocation5 + $0x70] sm:$0xff] %v46
    %55 = vst [vmem:[#allocation5 + $0x78] sm:$0xff] %v47
    %v56 = vld [vmem:[#allocation2 + $0x40] sm:$0xff]
    %v57 = vld [vmem:[#allocation2 + $0x48] sm:$0xff]
    %v58 = vld [vmem:[#allocation2 + $0x50] sm:$0xff]
    %v59 = vld [vmem:[#allocation2 + $0x58] sm:$0xff]
    %v60 = vld [vmem:[#allocation2 + $0x60] sm:$0xff]
    %v61 = vld [vmem:[#allocation2 + $0x68] sm:$0xff]
    %v62 = vld [vmem:[#allocation2 + $0x70] sm:$0xff]
    %v63 = vld [vmem:[#allocation2 + $0x78] sm:$0xff]
    %64 = vst [vmem:[#allocation5 + $0x80] sm:$0xff] %v56
    %65 = vst [vmem:[#allocation5 + $0x88] sm:$0xff] %v57
    %66 = vst [vmem:[#allocation5 + $0x90] sm:$0xff] %v58
    %67 = vst [vmem:[#allocation5 + $0x98] sm:$0xff] %v59
    %68 = vst [vmem:[#allocation5 + $0xa0] sm:$0xff] %v60
    %69 = vst [vmem:[#allocation5 + $0xa8] sm:$0xff] %v61
    %70 = vst [vmem:[#allocation5 + $0xb0] sm:$0xff] %v62
    %71 = vst [vmem:[#allocation5 + $0xb8] sm:$0xff] %v63
    %v72 = vld [vmem:[%s39 + $0x40] sm:$0xff]
    %v73 = vld [vmem:[%s39 + $0x48] sm:$0xff]
    %v74 = vld [vmem:[%s39 + $0x50] sm:$0xff]
    %v75 = vld [vmem:[%s39 + $0x58] sm:$0xff]
    %v76 = vld [vmem:[%s39 + $0x60] sm:$0xff]
    %v77 = vld [vmem:[%s39 + $0x68] sm:$0xff]
    %v78 = vld [vmem:[%s39 + $0x70] sm:$0xff]
    %v79 = vld [vmem:[%s39 + $0x78] sm:$0xff]
    %80 = vst [vmem:[#allocation5 + $0xc0] sm:$0xff] %v72
    %81 = vst [vmem:[#allocation5 + $0xc8] sm:$0xff] %v73
    %82 = vst [vmem:[#allocation5 + $0xd0] sm:$0xff] %v74
    %83 = vst [vmem:[#allocation5 + $0xd8] sm:$0xff] %v75
    %84 = vst [vmem:[#allocation5 + $0xe0] sm:$0xff] %v76
    %85 = vst [vmem:[#allocation5 + $0xe8] sm:$0xff] %v77
    %86 = vst [vmem:[#allocation5 + $0xf0] sm:$0xff] %v78
    %87 = vst [vmem:[#allocation5 + $0xf8] sm:$0xff] %v79
    %v88 = vld [vmem:[#allocation2 + $0x80] sm:$0xff]
    %v89 = vld [vmem:[#allocation2 + $0x88] sm:$0xff]
    %v90 = vld [vmem:[#allocation2 + $0x90] sm:$0xff]
    %v91 = vld [vmem:[#allocation2 + $0x98] sm:$0xff]
    %v92 = vld [vmem:[#allocation2 + $0xa0] sm:$0xff]
    %v93 = vld [vmem:[#allocation2 + $0xa8] sm:$0xff]
    %v94 = vld [vmem:[#allocation2 + $0xb0] sm:$0xff]
    %v95 = vld [vmem:[#allocation2 + $0xb8] sm:$0xff]
    %96 = vst [vmem:[#allocation5 + $0x100] sm:$0xff] %v88
    %97 = vst [vmem:[#allocation5 + $0x108] sm:$0xff] %v89
    %98 = vst [vmem:[#allocation5 + $0x110] sm:$0xff] %v90
    %99 = vst [vmem:[#allocation5 + $0x118] sm:$0xff] %v91
    %100 = vst [vmem:[#allocation5 + $0x120] sm:$0xff] %v92
    %101 = vst [vmem:[#allocation5 + $0x128] sm:$0xff] %v93
    %102 = vst [vmem:[#allocation5 + $0x130] sm:$0xff] %v94
    %103 = vst [vmem:[#allocation5 + $0x138] sm:$0xff] %v95
    %v104 = vld [vmem:[%s39 + $0x80] sm:$0xff]
    %v105 = vld [vmem:[%s39 + $0x88] sm:$0xff]
    %v106 = vld [vmem:[%s39 + $0x90] sm:$0xff]
    %v107 = vld [vmem:[%s39 + $0x98] sm:$0xff]
    %v108 = vld [vmem:[%s39 + $0xa0] sm:$0xff]
    %v109 = vld [vmem:[%s39 + $0xa8] sm:$0xff]
    %v110 = vld [vmem:[%s39 + $0xb0] sm:$0xff]
    %v111 = vld [vmem:[%s39 + $0xb8] sm:$0xff]
    %112 = vst [vmem:[#allocation5 + $0x140] sm:$0xff] %v104
    %113 = vst [vmem:[#allocation5 + $0x148] sm:$0xff] %v105
    %114 = vst [vmem:[#allocation5 + $0x150] sm:$0xff] %v106
    %115 = vst [vmem:[#allocation5 + $0x158] sm:$0xff] %v107
    %116 = vst [vmem:[#allocation5 + $0x160] sm:$0xff] %v108
    %117 = vst [vmem:[#allocation5 + $0x168] sm:$0xff] %v109
    %118 = vst [vmem:[#allocation5 + $0x170] sm:$0xff] %v110
    %119 = vst [vmem:[#allocation5 + $0x178] sm:$0xff] %v111
    %v120 = vld [vmem:[#allocation2 + $0xc0] sm:$0xff]
    %v121 = vld [vmem:[#allocation2 + $0xc8] sm:$0xff]
    %v122 = vld [vmem:[#allocation2 + $0xd0] sm:$0xff]
    %v123 = vld [vmem:[#allocation2 + $0xd8] sm:$0xff]
    %v124 = vld [vmem:[#allocation2 + $0xe0] sm:$0xff]
    %v125 = vld [vmem:[#allocation2 + $0xe8] sm:$0xff]
    %v126 = vld [vmem:[#allocation2 + $0xf0] sm:$0xff]
    %v127 = vld [vmem:[#allocation2 + $0xf8] sm:$0xff]
    %128 = vst [vmem:[#allocation5 + $0x180] sm:$0xff] %v120
    %129 = vst [vmem:[#allocation5 + $0x188] sm:$0xff] %v121
    %130 = vst [vmem:[#allocation5 + $0x190] sm:$0xff] %v122
    %131 = vst [vmem:[#allocation5 + $0x198] sm:$0xff] %v123
    %132 = vst [vmem:[#allocation5 + $0x1a0] sm:$0xff] %v124
    %133 = vst [vmem:[#allocation5 + $0x1a8] sm:$0xff] %v125
    %134 = vst [vmem:[#allocation5 + $0x1b0] sm:$0xff] %v126
    %135 = vst [vmem:[#allocation5 + $0x1b8] sm:$0xff] %v127
    %v136 = vld [vmem:[%s39 + $0xc0] sm:$0xff]
    %v137 = vld [vmem:[%s39 + $0xc8] sm:$0xff]
    %v138 = vld [vmem:[%s39 + $0xd0] sm:$0xff]
    %v139 = vld [vmem:[%s39 + $0xd8] sm:$0xff]
    %v140 = vld [vmem:[%s39 + $0xe0] sm:$0xff]
    %v141 = vld [vmem:[%s39 + $0xe8] sm:$0xff]
    %v142 = vld [vmem:[%s39 + $0xf0] sm:$0xff]
    %v143 = vld [vmem:[%s39 + $0xf8] sm:$0xff]
    %144 = vst [vmem:[#allocation5 + $0x1c0] sm:$0xff] %v136
    %145 = vst [vmem:[#allocation5 + $0x1c8] sm:$0xff] %v137
    %146 = vst [vmem:[#allocation5 + $0x1d0] sm:$0xff] %v138
    %147 = vst [vmem:[#allocation5 + $0x1d8] sm:$0xff] %v139
    %148 = vst [vmem:[#allocation5 + $0x1e0] sm:$0xff] %v140
    %149 = vst [vmem:[#allocation5 + $0x1e8] sm:$0xff] %v141
    %150 = vst [vmem:[#allocation5 + $0x1f0] sm:$0xff] %v142
    %151 = vst [vmem:[#allocation5 + $0x1f8] sm:$0xff] %v143
    %s152 = scalar_lea.vmem [#allocation2], 512
    %v153 = vld [vmem:[%s152] sm:$0xff]
    %v154 = vld [vmem:[%s152 + $0x8] sm:$0xff]
    %v155 = vld [vmem:[%s152 + $0x10] sm:$0xff]
    %v156 = vld [vmem:[%s152 + $0x18] sm:$0xff]
    %v157 = vld [vmem:[%s152 + $0x20] sm:$0xff]
    %v158 = vld [vmem:[%s152 + $0x28] sm:$0xff]
    %v159 = vld [vmem:[%s152 + $0x30] sm:$0xff]
    %v160 = vld [vmem:[%s152 + $0x38] sm:$0xff]
    %161 = vst [vmem:[#allocation5 + $0x200] sm:$0xff] %v153
    %162 = vst [vmem:[#allocation5 + $0x208] sm:$0xff] %v154
    %163 = vst [vmem:[#allocation5 + $0x210] sm:$0xff] %v155
    %164 = vst [vmem:[#allocation5 + $0x218] sm:$0xff] %v156
    %165 = vst [vmem:[#allocation5 + $0x220] sm:$0xff] %v157
    %166 = vst [vmem:[#allocation5 + $0x228] sm:$0xff] %v158
    %167 = vst [vmem:[#allocation5 + $0x230] sm:$0xff] %v159
    %168 = vst [vmem:[#allocation5 + $0x238] sm:$0xff] %v160
    %s169 = scalar_lea.vmem [#allocation2], 768
    %v170 = vld [vmem:[%s169] sm:$0xff]
    %v171 = vld [vmem:[%s169 + $0x8] sm:$0xff]
    %v172 = vld [vmem:[%s169 + $0x10] sm:$0xff]
    %v173 = vld [vmem:[%s169 + $0x18] sm:$0xff]
    %v174 = vld [vmem:[%s169 + $0x20] sm:$0xff]
    %v175 = vld [vmem:[%s169 + $0x28] sm:$0xff]
    %v176 = vld [vmem:[%s169 + $0x30] sm:$0xff]
    %v177 = vld [vmem:[%s169 + $0x38] sm:$0xff]
    %178 = vst [vmem:[#allocation5 + $0x240] sm:$0xff] %v170
    %179 = vst [vmem:[#allocation5 + $0x248] sm:$0xff] %v171
    %180 = vst [vmem:[#allocation5 + $0x250] sm:$0xff] %v172
    %181 = vst [vmem:[#allocation5 + $0x258] sm:$0xff] %v173
    %182 = vst [vmem:[#allocation5 + $0x260] sm:$0xff] %v174
    %183 = vst [vmem:[#allocation5 + $0x268] sm:$0xff] %v175
    %184 = vst [vmem:[#allocation5 + $0x270] sm:$0xff] %v176
    %185 = vst [vmem:[#allocation5 + $0x278] sm:$0xff] %v177
    %v186 = vld [vmem:[%s152 + $0x40] sm:$0xff]
    %v187 = vld [vmem:[%s152 + $0x48] sm:$0xff]
    %v188 = vld [vmem:[%s152 + $0x50] sm:$0xff]
    %v189 = vld [vmem:[%s152 + $0x58] sm:$0xff]
    %v190 = vld [vmem:[%s152 + $0x60] sm:$0xff]
    %v191 = vld [vmem:[%s152 + $0x68] sm:$0xff]
    %v192 = vld [vmem:[%s152 + $0x70] sm:$0xff]
    %v193 = vld [vmem:[%s152 + $0x78] sm:$0xff]
    %194 = vst [vmem:[#allocation5 + $0x280] sm:$0xff] %v186
    %195 = vst [vmem:[#allocation5 + $0x288] sm:$0xff] %v187
    %196 = vst [vmem:[#allocation5 + $0x290] sm:$0xff] %v188
    %197 = vst [vmem:[#allocation5 + $0x298] sm:$0xff] %v189
    %198 = vst [vmem:[#allocation5 + $0x2a0] sm:$0xff] %v190
    %199 = vst [vmem:[#allocation5 + $0x2a8] sm:$0xff] %v191
    %200 = vst [vmem:[#allocation5 + $0x2b0] sm:$0xff] %v192
    %201 = vst [vmem:[#allocation5 + $0x2b8] sm:$0xff] %v193
    %v202 = vld [vmem:[%s169 + $0x40] sm:$0xff]
    %v203 = vld [vmem:[%s169 + $0x48] sm:$0xff]
    %v204 = vld [vmem:[%s169 + $0x50] sm:$0xff]
    %v205 = vld [vmem:[%s169 + $0x58] sm:$0xff]
    %v206 = vld [vmem:[%s169 + $0x60] sm:$0xff]
    %v207 = vld [vmem:[%s169 + $0x68] sm:$0xff]
    %v208 = vld [vmem:[%s169 + $0x70] sm:$0xff]
    %v209 = vld [vmem:[%s169 + $0x78] sm:$0xff]
    %210 = vst [vmem:[#allocation5 + $0x2c0] sm:$0xff] %v202
    %211 = vst [vmem:[#allocation5 + $0x2c8] sm:$0xff] %v203
    %212 = vst [vmem:[#allocation5 + $0x2d0] sm:$0xff] %v204
    %213 = vst [vmem:[#allocation5 + $0x2d8] sm:$0xff] %v205
    %214 = vst [vmem:[#allocation5 + $0x2e0] sm:$0xff] %v206
    %215 = vst [vmem:[#allocation5 + $0x2e8] sm:$0xff] %v207
    %216 = vst [vmem:[#allocation5 + $0x2f0] sm:$0xff] %v208
    %217 = vst [vmem:[#allocation5 + $0x2f8] sm:$0xff] %v209
    %v218 = vld [vmem:[%s152 + $0x80] sm:$0xff]
    %v219 = vld [vmem:[%s152 + $0x88] sm:$0xff]
    %v220 = vld [vmem:[%s152 + $0x90] sm:$0xff]
    %v221 = vld [vmem:[%s152 + $0x98] sm:$0xff]
    %v222 = vld [vmem:[%s152 + $0xa0] sm:$0xff]
    %v223 = vld [vmem:[%s152 + $0xa8] sm:$0xff]
    %v224 = vld [vmem:[%s152 + $0xb0] sm:$0xff]
    %v225 = vld [vmem:[%s152 + $0xb8] sm:$0xff]
    %226 = vst [vmem:[#allocation5 + $0x300] sm:$0xff] %v218
    %227 = vst [vmem:[#allocation5 + $0x308] sm:$0xff] %v219
    %228 = vst [vmem:[#allocation5 + $0x310] sm:$0xff] %v220
    %229 = vst [vmem:[#allocation5 + $0x318] sm:$0xff] %v221
    %230 = vst [vmem:[#allocation5 + $0x320] sm:$0xff] %v222
    %231 = vst [vmem:[#allocation5 + $0x328] sm:$0xff] %v223
    %232 = vst [vmem:[#allocation5 + $0x330] sm:$0xff] %v224
    %233 = vst [vmem:[#allocation5 + $0x338] sm:$0xff] %v225
    %v234 = vld [vmem:[%s169 + $0x80] sm:$0xff]
    %v235 = vld [vmem:[%s169 + $0x88] sm:$0xff]
    %v236 = vld [vmem:[%s169 + $0x90] sm:$0xff]
    %v237 = vld [vmem:[%s169 + $0x98] sm:$0xff]
    %v238 = vld [vmem:[%s169 + $0xa0] sm:$0xff]
    %v239 = vld [vmem:[%s169 + $0xa8] sm:$0xff]
    %v240 = vld [vmem:[%s169 + $0xb0] sm:$0xff]
    %v241 = vld [vmem:[%s169 + $0xb8] sm:$0xff]
    %242 = vst [vmem:[#allocation5 + $0x340] sm:$0xff] %v234
    %243 = vst [vmem:[#allocation5 + $0x348] sm:$0xff] %v235
    %244 = vst [vmem:[#allocation5 + $0x350] sm:$0xff] %v236
    %245 = vst [vmem:[#allocation5 + $0x358] sm:$0xff] %v237
    %246 = vst [vmem:[#allocation5 + $0x360] sm:$0xff] %v238
    %247 = vst [vmem:[#allocation5 + $0x368] sm:$0xff] %v239
    %248 = vst [vmem:[#allocation5 + $0x370] sm:$0xff] %v240
    %249 = vst [vmem:[#allocation5 + $0x378] sm:$0xff] %v241
    %v250 = vld [vmem:[%s152 + $0xc0] sm:$0xff]
    %v251 = vld [vmem:[%s152 + $0xc8] sm:$0xff]
    %v252 = vld [vmem:[%s152 + $0xd0] sm:$0xff]
    %v253 = vld [vmem:[%s152 + $0xd8] sm:$0xff]
    %v254 = vld [vmem:[%s152 + $0xe0] sm:$0xff]
    %v255 = vld [vmem:[%s152 + $0xe8] sm:$0xff]
    %v256 = vld [vmem:[%s152 + $0xf0] sm:$0xff]
    %v257 = vld [vmem:[%s152 + $0xf8] sm:$0xff]
    %258 = vst [vmem:[#allocation5 + $0x380] sm:$0xff] %v250
    %259 = vst [vmem:[#allocation5 + $0x388] sm:$0xff] %v251
    %260 = vst [vmem:[#allocation5 + $0x390] sm:$0xff] %v252
    %261 = vst [vmem:[#allocation5 + $0x398] sm:$0xff] %v253
    %262 = vst [vmem:[#allocation5 + $0x3a0] sm:$0xff] %v254
    %263 = vst [vmem:[#allocation5 + $0x3a8] sm:$0xff] %v255
    %264 = vst [vmem:[#allocation5 + $0x3b0] sm:$0xff] %v256
    %265 = vst [vmem:[#allocation5 + $0x3b8] sm:$0xff] %v257
    %v266 = vld [vmem:[%s169 + $0xc0] sm:$0xff]
    %v267 = vld [vmem:[%s169 + $0xc8] sm:$0xff]
    %v268 = vld [vmem:[%s169 + $0xd0] sm:$0xff]
    %v269 = vld [vmem:[%s169 + $0xd8] sm:$0xff]
    %v270 = vld [vmem:[%s169 + $0xe0] sm:$0xff]
    %v271 = vld [vmem:[%s169 + $0xe8] sm:$0xff]
    %v272 = vld [vmem:[%s169 + $0xf0] sm:$0xff]
    %v273 = vld [vmem:[%s169 + $0xf8] sm:$0xff]
    %274 = vst [vmem:[#allocation5 + $0x3c0] sm:$0xff] %v266
    %275 = vst [vmem:[#allocation5 + $0x3c8] sm:$0xff] %v267
    %276 = vst [vmem:[#allocation5 + $0x3d0] sm:$0xff] %v268
    %277 = vst [vmem:[#allocation5 + $0x3d8] sm:$0xff] %v269
    %278 = vst [vmem:[#allocation5 + $0x3e0] sm:$0xff] %v270
    %279 = vst [vmem:[#allocation5 + $0x3e8] sm:$0xff] %v271
    %280 = vst [vmem:[#allocation5 + $0x3f0] sm:$0xff] %v272
    %281 = vst [vmem:[#allocation5 + $0x3f8] sm:$0xff] %v273
    // Predicated region
    $region10: #{tpu_custom_call.1} parent=1 // pred_check
      _
    $region11: #{tpu_custom_call.1} parent=1 // pred_check_branch
      %283 = sbr.rel (0) target = $region13
    $region12: #{tpu_custom_call.1} parent=1 // pred_region
      %s285 = ssub.s32 16384, 16384
      %286 = vsyncadd [#allocation4], %s285
      %s288 = sshll.u32 [#allocation5], 4
      %s289 = int_to_ptr.vmem [resolvable:$true] %s288
      %291 = dma.vmem_to_hbm [thread:$0]  %s289, 16384, %s1, [#allocation4]
    $region13: #{tpu_custom_call.1} parent=1 // pred_fallthru
      _
    // Predicated region
    $region14: #{tpu_custom_call.1} parent=1 // pred_check
      _
    $region15: #{tpu_custom_call.1} parent=1 // pred_check_branch
      %293 = sbr.rel (0) target = $region17
    $region16: #{tpu_custom_call.1} parent=1 // pred_region
      %294 = dma.done [#allocation4], 16384
    $region17: #{tpu_custom_call.1} parent=1 // pred_fallthru
      _
    %295 = vsyncpa [#allocation3], 1
    %296 = vsyncpa [#allocation4], 1

</llo_original>
